<compile_context>
chip_gen: v6e
topology: v6e:2x2x1
jax: 0.10.0
libtpu: 0.0.40
codegen_flags: <defaults>
</compile_context>

<pallas_src>
import math

import jax
import jax.numpy as jnp
from jax.experimental import pallas as pl
from jax.experimental.pallas import tpu as pltpu

_LANE = 128
_MIB = 1024 * 1024


def _copy_kernel(x_ref, o_ref):
    # x_ref / o_ref: (rows_per_step, cols) lane-dense tiles.
    o_ref[...] = x_ref[...]


def _round_down(x, m):
    return (x // m) * m


def _round_up(x, m):
    return ((x + m - 1) // m) * m


def _budget_and_vmem_limit():
    """Per-generation tile budget (bytes per buffer) and scoped-VMEM limit."""
    budget, vmem_limit = 4 * _MIB, 32 * _MIB  # conservative default
    try:
        info = pltpu.get_tpu_info()
        vmem_cap = getattr(info, "vmem_capacity_bytes", None)
        if vmem_cap is not None:
            if vmem_cap <= 64 * _MIB:
                # v7x-class: 64 MiB VMEM, ~3.2 TB/s HBM.  Bigger tiles amortize
                # the ~0.35 us/step pipeline overhead; 4 * 10 MiB < 48 MiB scoped.
                budget, vmem_limit = 10 * _MIB, 48 * _MIB
            else:
                # v5e/v6e-class (128 MiB physical).  v5e's *default* scoped
                # limit is only 16 MiB, so the explicit limit below matters.
                budget, vmem_limit = 8 * _MIB, 40 * _MIB
    except Exception:
        pass
    return budget, vmem_limit


def _choose_view_and_tiles(rows, F, itemsize, budget_bytes):
    """Pick a lane-dense 2D factorization of the flat contiguous buffer and a
    sublane-aligned row block whose tile fits the per-buffer VMEM budget."""
    n = rows * F
    sub = max(8, 32 // itemsize)  # dtype-native packed-sublane count

    if n % _LANE == 0:
        # A contiguous copy is free to pick any 2D factorization: choose cols
        # as the largest multiple of 128 dividing n such that one `sub`-row
        # slab still fits the budget -> unmasked full-width stores.
        cap_cols = max(_LANE, _round_down(budget_bytes // (itemsize * sub), _LANE))
        cols = _LANE
        k = min(cap_cols, n) // _LANE
        while k >= 1:
            c = k * _LANE
            if n % c == 0:
                cols = c
                break
            k -= 1
        vrows = n // cols
    else:
        # Ragged total element count: keep the natural (T*B, prod(rest)) view.
        vrows, cols = rows, F

    row_bytes = max(cols * itemsize, 1)
    rows_per_step = _round_down(budget_bytes // row_bytes, sub)
    if rows_per_step <= 0:
        # One packed-sublane slab of very wide (ragged) rows exceeds the
        # budget: clamp and let the caller raise the scoped-VMEM limit.
        # TODO(synk): 2D-tile the lane axis for ragged, extremely wide rows.
        rows_per_step = min(vrows, sub)
    if rows_per_step >= vrows:
        rows_per_step = vrows
        # Guarantee >=2 grid steps on medium/large inputs so v7x's two
        # TensorCores can both be used on the "parallel" row axis.
        if vrows >= 2 * sub:
            rows_per_step = _round_up(pl.cdiv(vrows, 2), sub)
    return vrows, cols, rows_per_step


def merge_temporal_dim(x_seq: jax.Array, use_pallas: bool = True) -> jax.Array:
    """Equivalent of MergeTemporalDim.forward: (T, B, *rest) -> (T*B, *rest)."""
    T, B = x_seq.shape[0], x_seq.shape[1]
    rest = tuple(x_seq.shape[2:])
    out_shape = (T * B,) + rest

    if not use_pallas:
        # Production fast path: flatten(0, 1) on a contiguous array is a
        # metadata-only reshape -> zero data movement, no kernel needed.
        return jnp.reshape(x_seq, out_shape)

    rows = T * B
    F = math.prod(rest) if rest else 1
    itemsize = jnp.dtype(x_seq.dtype).itemsize

    budget, vmem_limit = _budget_and_vmem_limit()
    vrows, cols, rows_per_step = _choose_view_and_tiles(rows, F, itemsize, budget)

    # Lane-dense 2D view; metadata-only reshape for a contiguous input.
    x2d = jnp.reshape(x_seq, (vrows, cols))

    tile_bytes = rows_per_step * cols * itemsize
    # In+out, double-buffered, plus headroom for internal scratch.
    vmem_limit = int(max(vmem_limit, 4 * tile_bytes + 2 * _MIB))

    grid = (pl.cdiv(vrows, rows_per_step),)
    total_bytes = vrows * cols * itemsize
    cost = pl.CostEstimate(
        flops=0,
        transcendentals=0,
        bytes_accessed=2 * total_bytes,  # read everything + write everything
    )

    out2d = pl.pallas_call(
        _copy_kernel,
        out_shape=jax.ShapeDtypeStruct((vrows, cols), x_seq.dtype),
        grid=grid,
        in_specs=[pl.BlockSpec((rows_per_step, cols), lambda i: (i, 0))],
        out_specs=pl.BlockSpec((rows_per_step, cols), lambda i: (i, 0)),
        compiler_params=pltpu.CompilerParams(
            dimension_semantics=("parallel",),
            vmem_limit_bytes=vmem_limit,
        ),
        cost_estimate=cost,
    )(x2d)

    # Metadata-only reshape back to (T*B, *rest).
    return jnp.reshape(out2d, out_shape)


if __name__ == "__main__":
    # Small shapes consistent with an SNN forward: T=8 timesteps, batch=2,
    # channels=4, spatial 16x16.
    T, B, C, H, W = 8, 2, 4, 16, 16
    key = jax.random.PRNGKey(0)
    x_seq = jax.random.normal(key, (T, B, C, H, W), dtype=jnp.float32)

    out = merge_temporal_dim(x_seq)
    out = jax.block_until_ready(out)

    # Reference: plain reshape (what flatten(0,1).contiguous() does).
    ref = jnp.reshape(x_seq, (T * B, C, H, W))
    assert out.shape == (T * B, C, H, W)
    assert out.dtype == x_seq.dtype
    assert bool(jnp.array_equal(out, ref))

    # Also exercise the production fast path (no kernel, metadata-only).
    fast = jax.block_until_ready(merge_temporal_dim(x_seq, use_pallas=False))
    assert bool(jnp.array_equal(fast, ref))

    print("KERNEL_OK")
</pallas_src>

<mosaic_0001>
module attributes {stable_mosaic.version = 11 : i64} {
  func.func @_copy_kernel(%arg0: i32, %arg1: memref<1x16384xf32, #tpu.memory_space<vmem>>, %arg2: memref<1x16384xf32, #tpu.memory_space<vmem>>) attributes {dimension_semantics = [#tpu.dimension_semantics<parallel>], iteration_bounds = array<i64: 1>, scalar_prefetch = 0 : i64, scratch_operands = 0 : i64, tpu.core_type = #tpu.core_type<tc>, window_params = [{transform_indices = @transform_0, window_bounds = array<i64: 1, 16384>}, {transform_indices = @transform_1, window_bounds = array<i64: 1, 16384>}]} {
    %c0 = arith.constant 0 : index
    %c0_0 = arith.constant 0 : index
    %0 = vector.load %arg1[%c0, %c0_0] : memref<1x16384xf32, #tpu.memory_space<vmem>>, vector<1x16384xf32>
    %c0_1 = arith.constant 0 : index
    %c0_2 = arith.constant 0 : index
    %1 = vector.load %arg2[%c0_1, %c0_2] : memref<1x16384xf32, #tpu.memory_space<vmem>>, vector<1x16384xf32>
    tpu.vector_store %arg2[%c0_1, %c0_2], %0 {strides = array<i32>} : memref<1x16384xf32, #tpu.memory_space<vmem>>, vector<1x16384xf32>,
    return
  }
  func.func @transform_0(%arg0: i32) -> (i32, i32) {
    %c0_i32 = arith.constant 0 : i32
    %c0_i32_0 = arith.constant 0 : i32
    return %arg0, %c0_i32 : i32, i32
  }
  func.func @transform_1(%arg0: i32) -> (i32, i32) {
    %c0_i32 = arith.constant 0 : i32
    %c0_i32_0 = arith.constant 0 : i32
    return %arg0, %c0_i32 : i32, i32
  }
}

</mosaic_0001>

<llo_original>
// kernel: tpu_custom_call.1
$region0: #{tpu_custom_call.1}
  #allocation0 [shape = 'u32[]', space=smem, size = 0x4, offset = 0x4, fixed_abs, tag = 'smem constant byte address 0x4 - core index']
  #allocation1 [shape = 'u32[144,128]{1,0:T(1,128)}', space=vmem, size = 0x12000, scoped, tag = 'internal scratch']
  %s0 = inlined_call_operand.hbm [shape: f32[1,16384], index: 0, kind: input, shape index: {}]
  %s1 = inlined_call_operand.hbm [shape: f32[1,16384], index: 1, kind: output, shape index: {}]
  %s2 = sld [smem:[#allocation0]]
  $region18: #{tpu_custom_call.1} parent=0
    _
  %s4 = ssub.s32 1, %s2
  %s5 = scalar_select 0, %s4, %s2
  $region1: #{tpu_custom_call.1} parent=0
    #allocation2 [shape = 'u8[65536]{0}', space=vmem, size = 0x10000, scoped, tag = 'input window, operand 0, single buffered']
    #allocation3 [shape = 's32[1]{0}', space=sflag, size = 0x4, scoped, tag = 'scoped memory for tpu_custom_call.1']
    #allocation4 [shape = 's32[1]{0}', space=sflag, size = 0x4, scoped, tag = 'scoped memory for tpu_custom_call.1']
    #allocation5 [shape = 'u8[65536]{0}', space=vmem, size = 0x10000, scoped, tag = 'output window, operand 0, single buffered']
    %6 = vsyncpa [#allocation3], 0
    %7 = vsyncpa [#allocation4], 0
    // Predicated region
    $region2: #{tpu_custom_call.1} parent=1 // pred_check
      _
    $region3: #{tpu_custom_call.1} parent=1 // pred_check_branch
      %9 = sbr.rel (0) target = $region5
    $region4: #{tpu_custom_call.1} parent=1 // pred_region
      %s11 = ssub.s32 2048, 2048
      %12 = vsyncadd [#allocation3], %s11
      %s14 = sshll.u32 [#allocation2], 4
      %s15 = int_to_ptr.vmem [resolvable:$true] %s14
      %17 = dma.hbm_to_vmem [thread:$0]  %s0, 2048, %s15, [#allocation3]
    $region5: #{tpu_custom_call.1} parent=1 // pred_fallthru
      _
    // Predicated region
    $region6: #{tpu_custom_call.1} parent=1 // pred_check
      _
    $region7: #{tpu_custom_call.1} parent=1 // pred_check_branch
      %19 = sbr.rel (0) target = $region9
    $region8: #{tpu_custom_call.1} parent=1 // pred_region
      %20 = dma.done [#allocation3], 2048
    $region9: #{tpu_custom_call.1} parent=1 // pred_fallthru
      _
    %v21 = vld [vmem:[#allocation2] sm:$0xff]
    %v22 = vld [vmem:[#allocation2 + $0x8] sm:$0xff]
    %v23 = vld [vmem:[#allocation2 + $0x10] sm:$0xff]
    %v24 = vld [vmem:[#allocation2 + $0x18] sm:$0xff]
    %v25 = vld [vmem:[#allocation2 + $0x20] sm:$0xff]
    %v26 = vld [vmem:[#allocation2 + $0x28] sm:$0xff]
    %v27 = vld [vmem:[#allocation2 + $0x30] sm:$0xff]
    %v28 = vld [vmem:[#allocation2 + $0x38] sm:$0xff]
    %v29 = vld [vmem:[#allocation2 + $0x40] sm:$0xff]
    %v30 = vld [vmem:[#allocation2 + $0x48] sm:$0xff]
    %v31 = vld [vmem:[#allocation2 + $0x50] sm:$0xff]
    %v32 = vld [vmem:[#allocation2 + $0x58] sm:$0xff]
    %v33 = vld [vmem:[#allocation2 + $0x60] sm:$0xff]
    %v34 = vld [vmem:[#allocation2 + $0x68] sm:$0xff]
    %v35 = vld [vmem:[#allocation2 + $0x70] sm:$0xff]
    %v36 = vld [vmem:[#allocation2 + $0x78] sm:$0xff]
    %37 = vst [vmem:[#allocation5] sm:$0xff] %v21
    %38 = vst [vmem:[#allocation5 + $0x8] sm:$0xff] %v22
    %39 = vst [vmem:[#allocation5 + $0x10] sm:$0xff] %v23
    %40 = vst [vmem:[#allocation5 + $0x18] sm:$0xff] %v24
    %41 = vst [vmem:[#allocation5 + $0x20] sm:$0xff] %v25
    %42 = vst [vmem:[#allocation5 + $0x28] sm:$0xff] %v26
    %43 = vst [vmem:[#allocation5 + $0x30] sm:$0xff] %v27
    %44 = vst [vmem:[#allocation5 + $0x38] sm:$0xff] %v28
    %45 = vst [vmem:[#allocation5 + $0x40] sm:$0xff] %v29
    %46 = vst [vmem:[#allocation5 + $0x48] sm:$0xff] %v30
    %47 = vst [vmem:[#allocation5 + $0x50] sm:$0xff] %v31
    %48 = vst [vmem:[#allocation5 + $0x58] sm:$0xff] %v32
    %49 = vst [vmem:[#allocation5 + $0x60] sm:$0xff] %v33
    %50 = vst [vmem:[#allocation5 + $0x68] sm:$0xff] %v34
    %51 = vst [vmem:[#allocation5 + $0x70] sm:$0xff] %v35
    %52 = vst [vmem:[#allocation5 + $0x78] sm:$0xff] %v36
    // Predicated region
    $region10: #{tpu_custom_call.1} parent=1 // pred_check
      _
    $region11: #{tpu_custom_call.1} parent=1 // pred_check_branch
      %54 = sbr.rel (0) target = $region13
    $region12: #{tpu_custom_call.1} parent=1 // pred_region
      %s56 = ssub.s32 2048, 2048
      %57 = vsyncadd [#allocation4], %s56
      %s59 = sshll.u32 [#allocation5], 4
      %s60 = int_to_ptr.vmem [resolvable:$true] %s59
      %62 = dma.vmem_to_hbm [thread:$0]  %s60, 2048, %s1, [#allocation4]
    $region13: #{tpu_custom_call.1} parent=1 // pred_fallthru
      _
    // Predicated region
    $region14: #{tpu_custom_call.1} parent=1 // pred_check
      _
    $region15: #{tpu_custom_call.1} parent=1 // pred_check_branch
      %64 = sbr.rel (0) target = $region17
    $region16: #{tpu_custom_call.1} parent=1 // pred_region
      %65 = dma.done [#allocation4], 2048
    $region17: #{tpu_custom_call.1} parent=1 // pred_fallthru
      _
    %66 = vsyncpa [#allocation3], 1
    %67 = vsyncpa [#allocation4], 1

</llo_original>
